<compile_context>
chip_gen: v7x
topology: tpu7x:2x2x1
jax: 0.10.0
libtpu: 0.0.40
codegen_flags: <defaults>
</compile_context>

<pallas_src>
import jax
import jax.numpy as jnp
from jax.experimental import pallas as pl
from jax.experimental.pallas import tpu as pltpu

_LANES = 128


def _make_wce_kernel(num_channels):
    def _wce_kernel(t_ref, x_ref, out_ref):
        """One (batch, spatial-tile) grid step.

        t_ref:   (K, 128)    int32  class labels for this spatial tile
        x_ref:   (C, K, 128) native-dtype predicted probabilities
        out_ref: (1, 128)    f32    per-batch lane accumulator (resident across
                                     the spatial ("arbitrary") grid axis)
        """
        j = pl.program_id(1)

        @pl.when(j == 0)
        def _():
            out_ref[...] = jnp.zeros_like(out_ref)

        labels = t_ref[...]                                   # (K, 128) int32
        acc = jnp.zeros(labels.shape, jnp.float32)

        # C is small and static: unrolled channel loop keeps temporaries at
        # (K, 128) and compares labels against a scalar constant.
        # Targets are one-hot, so each element needs exactly one of
        # log(p) / log(1-p).  Padded elements (label == -1, p == 0) give
        # q == 1 and contribute exactly 0.
        for c in range(num_channels):
            p = x_ref[c].astype(jnp.float32)                  # (K, 128)
            q = jnp.where(labels == c, p, 1.0 - p)
            acc = acc - jnp.maximum(jnp.log(q), -100.0)       # nn.BCELoss clamp

        out_ref[...] += jnp.sum(acc, axis=0, keepdims=True)   # (1, 128)

    return _wce_kernel


def _largest_divisor_leq(n, cap):
    cap = max(1, min(cap, n))
    for d in range(cap, 0, -1):
        if n % d == 0:
            return d
    return 1


@jax.jit
def weighted_cross_entropy_loss(logits, targets):
    """logits: (N, C, Z, Y, X) probabilities in [0,1] (optionally (N,T,C,Z,Y,X));
    targets: (N, Z, Y, X) int labels (optionally (N,T,Z,Y,X))."""
    if logits.ndim == 6:                        # (N,T,C,Z,Y,X) -> (N*T,C,Z,Y,X)
        n_, t_ = logits.shape[:2]
        logits = logits.reshape((n_ * t_,) + logits.shape[2:])
        targets = targets.reshape((n_ * t_,) + targets.shape[2:])

    N, C = logits.shape[0], logits.shape[1]
    S = 1
    for d in logits.shape[2:]:
        S *= d

    # Layout-preserving flatten (no transpose, no dtype copy, no HBM movement).
    x = logits.reshape(N, C, S)
    t = targets.reshape(N, S).astype(jnp.int32)

    # Sublane packing for the native dtype: f32 -> 8, bf16 -> 16, int8/fp8 -> 32.
    itemsize = jnp.dtype(x.dtype).itemsize
    sub = 8 * max(1, 4 // itemsize)

    # Pad the flattened spatial axis so every block is tileable for this dtype.
    # Padding (p = 0, label = -1) contributes exactly 0 to the sum.
    pad_unit = sub * _LANES
    S_pad = ((S + pad_unit - 1) // pad_unit) * pad_unit
    if S_pad != S:
        x = jnp.pad(x, ((0, 0), (0, 0), (0, S_pad - S)))
        t = jnp.pad(t, ((0, 0), (0, S_pad - S)), constant_values=-1)

    k_total = S_pad // _LANES            # number of 128-lane chunks

    # Spatial tile: ~2 MiB of logits (native dtype) per block, a multiple of the
    # sublane packing, and an exact divisor of k_total.
    max_chunks = max(sub, (2 << 20) // (C * _LANES * itemsize))
    k_tile = sub * _largest_divisor_leq(k_total // sub, max(1, max_chunks // sub))

    x = x.reshape(N, C, k_total, _LANES)
    t = t.reshape(N, k_total, _LANES)

    grid = (N, k_total // k_tile)

    partials = pl.pallas_call(
        _make_wce_kernel(C),
        out_shape=jax.ShapeDtypeStruct((N, 1, _LANES), jnp.float32),
        grid_spec=pltpu.PrefetchScalarGridSpec(
            num_scalar_prefetch=0,
            grid=grid,
            in_specs=[
                # targets: (1, k_tile, 128) slice, leading dim squeezed.
                pl.BlockSpec((None, k_tile, _LANES), lambda n, j: (n, j, 0)),
                # logits: (1, C, k_tile, 128) slice, leading dim squeezed.
                pl.BlockSpec((None, C, k_tile, _LANES), lambda n, j: (n, 0, j, 0)),
            ],
            # Per-batch lane accumulator, resident across the spatial axis.
            out_specs=pl.BlockSpec((None, 1, _LANES), lambda n, j: (n, 0, 0)),
        ),
        compiler_params=pltpu.CompilerParams(
            dimension_semantics=("parallel", "arbitrary"),
            vmem_limit_bytes=32 * 1024 * 1024,
        ),
    )(t, x)

    # sum_c mean_m(...) / C  ==  total_sum / (C * M), with M = N * S (unpadded).
    return jnp.sum(partials) / jnp.float32(C * N * S)


def _reference_loss(logits, targets):
    """Plain-JAX reference for validation (same math as nn.BCELoss-based module)."""
    N, C, Z, Y, X = logits.shape
    p = logits.astype(jnp.float32)
    onehot = (
        jnp.arange(C, dtype=jnp.int32)[None, :, None, None, None] == targets[:, None]
    ).astype(jnp.float32)
    log_p = jnp.maximum(jnp.log(p), -100.0)
    log_1mp = jnp.maximum(jnp.log(1.0 - p), -100.0)
    bce = -(onehot * log_p + (1.0 - onehot) * log_1mp)
    return jnp.sum(bce) / (C * N * Z * Y * X)


if __name__ == "__main__":
    key = jax.random.PRNGKey(0)
    k1, k2 = jax.random.split(key)

    N, C, Z, Y, X = 2, 4, 4, 8, 16  # labels = [0, 1, 2, 3]
    # BCELoss expects probabilities in [0, 1]; build them via sigmoid.
    logits = jax.nn.sigmoid(jax.random.normal(k1, (N, C, Z, Y, X), dtype=jnp.float32))
    targets = jax.random.randint(k2, (N, Z, Y, X), 0, C, dtype=jnp.int32)

    loss = weighted_cross_entropy_loss(logits, targets)
    loss = jax.block_until_ready(loss)

    ref = _reference_loss(logits, targets)
    assert jnp.allclose(loss, ref, rtol=1e-5, atol=1e-5), (loss, ref)

    print("KERNEL_OK")
</pallas_src>

<mosaic_0001>
module attributes {stable_mosaic.version = 11 : i64} {
  func.func @_wce_kernel(%arg0: i32, %arg1: i32, %arg2: memref<1x8x128xi32, #tpu.memory_space<vmem>>, %arg3: memref<1x4x8x128xf32, #tpu.memory_space<vmem>>, %arg4: memref<1x1x128xf32, #tpu.memory_space<vmem>>) attributes {dimension_semantics = [#tpu.dimension_semantics<parallel>, #tpu.dimension_semantics<arbitrary>], iteration_bounds = array<i64: 2, 1>, scalar_prefetch = 0 : i64, scratch_operands = 0 : i64, tpu.core_type = #tpu.core_type<tc>, window_params = [{transform_indices = @transform_0, window_bounds = array<i64: 1, 8, 128>}, {transform_indices = @transform_1, window_bounds = array<i64: 1, 4, 8, 128>}, {transform_indices = @transform_2, window_bounds = array<i64: 1, 1, 128>}]} {
    %c0_i32 = arith.constant 0 : i32
    %0 = arith.cmpi eq, %arg1, %c0_i32 : i32
    %1 = arith.extui %0 : i1 to i32
    %c0_i32_0 = arith.constant 0 : i32
    %2 = arith.cmpi ne, %1, %c0_i32_0 : i32
    scf.if %2 {
      %cst_32 = arith.constant 0.000000e+00 : f32
      %58 = vector.broadcast %cst_32 : f32 to vector<1x128xf32>
      %c0_33 = arith.constant 0 : index
      %c0_34 = arith.constant 0 : index
      %c0_35 = arith.constant 0 : index
      %59 = vector.load %arg4[%c0_33, %c0_34, %c0_35] : memref<1x1x128xf32, #tpu.memory_space<vmem>>, vector<1x1x128xf32>
      %60 = vector.shape_cast %59 : vector<1x1x128xf32> to vector<1x128xf32>
      %61 = vector.shape_cast %58 : vector<1x128xf32> to vector<1x1x128xf32>
      tpu.vector_store %arg4[%c0_33, %c0_34, %c0_35], %61 {strides = array<i32>} : memref<1x1x128xf32, #tpu.memory_space<vmem>>, vector<1x1x128xf32>,
    } else {
    }
    %c0 = arith.constant 0 : index
    %c0_1 = arith.constant 0 : index
    %c0_2 = arith.constant 0 : index
    %3 = vector.load %arg2[%c0, %c0_1, %c0_2] : memref<1x8x128xi32, #tpu.memory_space<vmem>>, vector<1x8x128xi32>
    %4 = vector.shape_cast %3 : vector<1x8x128xi32> to vector<8x128xi32>
    %cst = arith.constant 0.000000e+00 : f32
    %5 = vector.broadcast %cst : f32 to vector<8x128xf32>
    %c0_3 = arith.constant 0 : index
    %c0_4 = arith.constant 0 : index
    %c0_5 = arith.constant 0 : index
    %c0_6 = arith.constant 0 : index
    %6 = vector.load %arg3[%c0_3, %c0_4, %c0_5, %c0_6] : memref<1x4x8x128xf32, #tpu.memory_space<vmem>>, vector<1x1x8x128xf32>
    %7 = vector.shape_cast %6 : vector<1x1x8x128xf32> to vector<8x128xf32>
    %c0_i32_7 = arith.constant 0 : i32
    %8 = vector.broadcast %c0_i32_7 : i32 to vector<8x128xi32>
    %9 = arith.cmpi eq, %4, %8 : vector<8x128xi32>
    %cst_8 = arith.constant 1.000000e+00 : f32
    %10 = vector.broadcast %cst_8 : f32 to vector<8x128xf32>
    %11 = arith.subf %10, %7 : vector<8x128xf32>
    %12 = arith.select %9, %7, %11 : vector<8x128xi1>, vector<8x128xf32>
    %13 = math.log %12 : vector<8x128xf32>
    %cst_9 = arith.constant -1.000000e+02 : f32
    %14 = vector.broadcast %cst_9 : f32 to vector<8x128xf32>
    %15 = arith.maximumf %13, %14 : vector<8x128xf32>
    %16 = arith.subf %5, %15 : vector<8x128xf32>
    %c0_10 = arith.constant 0 : index
    %c1 = arith.constant 1 : index
    %c0_11 = arith.constant 0 : index
    %c0_12 = arith.constant 0 : index
    %17 = vector.load %arg3[%c0_10, %c1, %c0_11, %c0_12] : memref<1x4x8x128xf32, #tpu.memory_space<vmem>>, vector<1x1x8x128xf32>
    %18 = vector.shape_cast %17 : vector<1x1x8x128xf32> to vector<8x128xf32>
    %c1_i32 = arith.constant 1 : i32
    %19 = vector.broadcast %c1_i32 : i32 to vector<8x128xi32>
    %20 = arith.cmpi eq, %4, %19 : vector<8x128xi32>
    %cst_13 = arith.constant 1.000000e+00 : f32
    %21 = vector.broadcast %cst_13 : f32 to vector<8x128xf32>
    %22 = arith.subf %21, %18 : vector<8x128xf32>
    %23 = arith.select %20, %18, %22 : vector<8x128xi1>, vector<8x128xf32>
    %24 = math.log %23 : vector<8x128xf32>
    %cst_14 = arith.constant -1.000000e+02 : f32
    %25 = vector.broadcast %cst_14 : f32 to vector<8x128xf32>
    %26 = arith.maximumf %24, %25 : vector<8x128xf32>
    %27 = arith.subf %16, %26 : vector<8x128xf32>
    %c0_15 = arith.constant 0 : index
    %c2 = arith.constant 2 : index
    %c0_16 = arith.constant 0 : index
    %c0_17 = arith.constant 0 : index
    %28 = vector.load %arg3[%c0_15, %c2, %c0_16, %c0_17] : memref<1x4x8x128xf32, #tpu.memory_space<vmem>>, vector<1x1x8x128xf32>
    %29 = vector.shape_cast %28 : vector<1x1x8x128xf32> to vector<8x128xf32>
    %c2_i32 = arith.constant 2 : i32
    %30 = vector.broadcast %c2_i32 : i32 to vector<8x128xi32>
    %31 = arith.cmpi eq, %4, %30 : vector<8x128xi32>
    %cst_18 = arith.constant 1.000000e+00 : f32
    %32 = vector.broadcast %cst_18 : f32 to vector<8x128xf32>
    %33 = arith.subf %32, %29 : vector<8x128xf32>
    %34 = arith.select %31, %29, %33 : vector<8x128xi1>, vector<8x128xf32>
    %35 = math.log %34 : vector<8x128xf32>
    %cst_19 = arith.constant -1.000000e+02 : f32
    %36 = vector.broadcast %cst_19 : f32 to vector<8x128xf32>
    %37 = arith.maximumf %35, %36 : vector<8x128xf32>
    %38 = arith.subf %27, %37 : vector<8x128xf32>
    %c0_20 = arith.constant 0 : index
    %c3 = arith.constant 3 : index
    %c0_21 = arith.constant 0 : index
    %c0_22 = arith.constant 0 : index
    %39 = vector.load %arg3[%c0_20, %c3, %c0_21, %c0_22] : memref<1x4x8x128xf32, #tpu.memory_space<vmem>>, vector<1x1x8x128xf32>
    %40 = vector.shape_cast %39 : vector<1x1x8x128xf32> to vector<8x128xf32>
    %c3_i32 = arith.constant 3 : i32
    %41 = vector.broadcast %c3_i32 : i32 to vector<8x128xi32>
    %42 = arith.cmpi eq, %4, %41 : vector<8x128xi32>
    %cst_23 = arith.constant 1.000000e+00 : f32
    %43 = vector.broadcast %cst_23 : f32 to vector<8x128xf32>
    %44 = arith.subf %43, %40 : vector<8x128xf32>
    %45 = arith.select %42, %40, %44 : vector<8x128xi1>, vector<8x128xf32>
    %46 = math.log %45 : vector<8x128xf32>
    %cst_24 = arith.constant -1.000000e+02 : f32
    %47 = vector.broadcast %cst_24 : f32 to vector<8x128xf32>
    %48 = arith.maximumf %46, %47 : vector<8x128xf32>
    %49 = arith.subf %38, %48 : vector<8x128xf32>
    %c0_25 = arith.constant 0 : index
    %c0_26 = arith.constant 0 : index
    %c0_27 = arith.constant 0 : index
    %50 = vector.load %arg4[%c0_25, %c0_26, %c0_27] : memref<1x1x128xf32, #tpu.memory_space<vmem>>, vector<1x1x128xf32>
    %51 = vector.shape_cast %50 : vector<1x1x128xf32> to vector<1x128xf32>
    %cst_28 = arith.constant dense<0.000000e+00> : vector<128xf32>
    %52 = vector.multi_reduction <add>, %49, %cst_28 [0] : vector<8x128xf32> to vector<128xf32>
    %53 = vector.shape_cast %52 : vector<128xf32> to vector<1x128xf32>
    %54 = arith.addf %51, %53 : vector<1x128xf32>
    %c0_29 = arith.constant 0 : index
    %c0_30 = arith.constant 0 : index
    %c0_31 = arith.constant 0 : index
    %55 = vector.load %arg4[%c0_29, %c0_30, %c0_31] : memref<1x1x128xf32, #tpu.memory_space<vmem>>, vector<1x1x128xf32>
    %56 = vector.shape_cast %55 : vector<1x1x128xf32> to vector<1x128xf32>
    %57 = vector.shape_cast %54 : vector<1x128xf32> to vector<1x1x128xf32>
    tpu.vector_store %arg4[%c0_29, %c0_30, %c0_31], %57 {strides = array<i32>} : memref<1x1x128xf32, #tpu.memory_space<vmem>>, vector<1x1x128xf32>,
    return
  }
  func.func @transform_0(%arg0: i32, %arg1: i32) -> (i32, i32, i32) {
    %c0_i32 = arith.constant 0 : i32
    %c0_i32_0 = arith.constant 0 : i32
    return %arg0, %arg1, %c0_i32 : i32, i32, i32
  }
  func.func @transform_1(%arg0: i32, %arg1: i32) -> (i32, i32, i32, i32) {
    %c0_i32 = arith.constant 0 : i32
    %c0_i32_0 = arith.constant 0 : i32
    %c0_i32_1 = arith.constant 0 : i32
    return %arg0, %c0_i32, %arg1, %c0_i32_0 : i32, i32, i32, i32
  }
  func.func @transform_2(%arg0: i32, %arg1: i32) -> (i32, i32, i32) {
    %c0_i32 = arith.constant 0 : i32
    %c0_i32_0 = arith.constant 0 : i32
    %c0_i32_1 = arith.constant 0 : i32
    return %arg0, %c0_i32, %c0_i32_0 : i32, i32, i32
  }
}

</mosaic_0001>

<llo_original>
// kernel: weighted_cross_entropy_loss.1
$region0: #{weighted_cross_entropy_loss.1}
  #allocation0 [shape = 'u32[]', space=smem, size = 0x4, offset = 0x4, fixed_abs, tag = 'smem constant byte address 0x4 - core index']
  #allocation1 [shape = 'u32[144,128]{1,0:T(1,128)}', space=vmem, size = 0x12000, scoped, tag = 'internal scratch']
  %s0 = inlined_call_operand.vmem [shape: s32[2,8,128], index: 0, kind: input, shape index: {}]
  %s1 = inlined_call_operand.vmem [shape: f32[2,4,8,128], index: 1, kind: input, shape index: {}]
  %s2 = inlined_call_operand.vmem [shape: f32[2,1,128], index: 2, kind: output, shape index: {}]
  %s3 = sld [smem:[#allocation0]]
  $region45: #{weighted_cross_entropy_loss.1} parent=0
    _
  %s5 = ssub.s32 1, %s3
  %s6 = scalar_select 0, %s5, %s3
  loop: start=0, step=1, limit=4
  $region2: #{weighted_cross_entropy_loss.1} parent=0 // loop_pre_header
    _
  $region3: #{weighted_cross_entropy_loss.1} parent=0 // loop_header
    %s8 = sphi 0, %s12
    %p9 = scmp.ge.s32.totalorder %s8, 4
    %s15 = sphi 0, %s27
    %s16 = sphi 0, %s23
    %s17 = sphi 0, %s15
    %s18 = sphi 0, %s16
    %s19 = sphi 0, %s17
    %s20 = sphi 0, %s18
    %s32 = sphi 0, %s34
    %s35 = sphi 0, %s32
    %s36 = sphi 0, %s35
    %s52 = sphi 0, %s36
    %s60 = sphi 0, %s62
    %s63 = sphi 0, %s60
    %s64 = sphi 0, %s63
    %s80 = sphi 0, %s64
    %s86 = sphi 0, %s88
    %s89 = sphi 0, %s86
    %s90 = sphi 0, %s89
    %s106 = sphi 0, %s90
  $region4: #{weighted_cross_entropy_loss.1} parent=0 // loop_header_branch
    %11 = sbr.rel (%p9) target = $region8
  $region5: #{weighted_cross_entropy_loss.1} parent=0 // loop_body
    %s13 = ssub.s32 %s8, 1
    %s14 = ssub.s32 %s8, 2
    %s21 = sadd.s32 1, %s16
    %p22 = scmp.ge.s32.totalorder %s21, 1
    %s23 = scalar_select %p22, 0, %s21
    %s24 = sadd.s32 1, %s15
    %s25 = scalar_select %p22, %s24, %s15
    %p26 = scmp.ge.s32.totalorder %s25, 2
    %s27 = scalar_select %p26, 0, %s25
    %s28 = ssub.s32 %s15, %s27
    %s29 = ssub.s32 %s16, %s23
    %s30 = sor.u32 %s28, %s29
    %p31 = scmp.eq.s32.totalorder %s30, 0
    %s33 = sadd.s32 %s32, 1
    %s34 = scalar_select %p31, %s32, %s33
    %p37 = pneg %p31
    %p38 = scmp.eq.s32.totalorder %s8, 1
    %p39 = por %p37, %p38
    %p40 = scmp.ne.s32.totalorder %s32, %s35
    %p41 = scmp.eq.s32.totalorder %s8, 0
    %p42 = por %p40, %p41
    %p43 = scmp.ne.s32.totalorder %s32, %s35
    %p44 = scmp.eq.s32.totalorder %s13, 1
    %p45 = por %p43, %p44
    %p46 = scmp.ne.s32.totalorder %s35, %s36
    %p47 = scmp.eq.s32.totalorder %s13, 0
    %p48 = por %p46, %p47
    %p49 = scmp.ne.s32.totalorder %s35, %s36
    %p50 = scmp.eq.s32.totalorder %s14, 1
    %p51 = por %p49, %p50
    %p53 = scmp.ne.s32.totalorder %s36, %s52
    %p54 = scmp.eq.s32.totalorder %s14, 0
    %p55 = por %p53, %p54
    %s56 = ssub.s32 %s15, %s27
    %s57 = ssub.s32 %s16, %s23
    %s58 = sor.u32 %s56, %s57
    %p59 = scmp.eq.s32.totalorder %s58, 0
    %s61 = sadd.s32 %s60, 1
    %s62 = scalar_select %p59, %s60, %s61
    %p65 = pneg %p59
    %p66 = scmp.eq.s32.totalorder %s8, 1
    %p67 = por %p65, %p66
    %p68 = scmp.ne.s32.totalorder %s60, %s63
    %p69 = scmp.eq.s32.totalorder %s8, 0
    %p70 = por %p68, %p69
    %p71 = scmp.ne.s32.totalorder %s60, %s63
    %p72 = scmp.eq.s32.totalorder %s13, 1
    %p73 = por %p71, %p72
    %p74 = scmp.ne.s32.totalorder %s63, %s64
    %p75 = scmp.eq.s32.totalorder %s13, 0
    %p76 = por %p74, %p75
    %p77 = scmp.ne.s32.totalorder %s63, %s64
    %p78 = scmp.eq.s32.totalorder %s14, 1
    %p79 = por %p77, %p78
    %p81 = scmp.ne.s32.totalorder %s64, %s80
    %p82 = scmp.eq.s32.totalorder %s14, 0
    %p83 = por %p81, %p82
    %s84 = ssub.s32 %s15, %s27
    %p85 = scmp.eq.s32.totalorder %s84, 0
    %s87 = sadd.s32 %s86, 1
    %s88 = scalar_select %p85, %s86, %s87
    %p91 = pneg %p85
    %p92 = scmp.eq.s32.totalorder %s8, 1
    %p93 = por %p91, %p92
    %p94 = scmp.ne.s32.totalorder %s86, %s89
    %p95 = scmp.eq.s32.totalorder %s8, 0
    %p96 = por %p94, %p95
    %p97 = scmp.ne.s32.totalorder %s86, %s89
    %p98 = scmp.eq.s32.totalorder %s13, 1
    %p99 = por %p97, %p98
    %p100 = scmp.ne.s32.totalorder %s89, %s90
    %p101 = scmp.eq.s32.totalorder %s13, 0
    %p102 = por %p100, %p101
    %p103 = scmp.ne.s32.totalorder %s89, %s90
    %p104 = scmp.eq.s32.totalorder %s14, 1
    %p105 = por %p103, %p104
    %p107 = scmp.ne.s32.totalorder %s90, %s106
    %p108 = scmp.eq.s32.totalorder %s14, 0
    %p109 = por %p107, %p108
    %p110 = scmp.le.s32.totalorder 1, %s8
    %p111 = scmp.lt.s32.totalorder %s8, 3
    %p112 = pnand %p110, %p111
    %p113 = pneg %p112
    // Predicated region
    $region9: #{weighted_cross_entropy_loss.1} parent=5 // pred_check
      _
    $region10: #{weighted_cross_entropy_loss.1} parent=5 // pred_check_branch
      %115 = sbr.rel (%p112) target = $region12
    $region11: #{weighted_cross_entropy_loss.1} parent=5 // pred_region
      %s116 = ssub.s32 %s8, 1
    $region12: #{weighted_cross_entropy_loss.1} parent=5 // pred_fallthru
      _
    %p117 = scmp.lt.s32.totalorder %s8, 2
    // Predicated region
    $region13: #{weighted_cross_entropy_loss.1} parent=5 // pred_check
      %p118 = pneg %p117
    $region14: #{weighted_cross_entropy_loss.1} parent=5 // pred_check_branch
      %120 = sbr.rel (%p118) target = $region16
    $region15: #{weighted_cross_entropy_loss.1} parent=5 // pred_region
      // Predicated region
      $region17: #{weighted_cross_entropy_loss.1} parent=15 // pred_check
        %p121 = pneg %p42
      $region18: #{weighted_cross_entropy_loss.1} parent=15 // pred_check_branch
        %123 = sbr.rel (%p121) target = $region20
      $region19: #{weighted_cross_entropy_loss.1} parent=15 // pred_region
        %p124 = scmp.lt.s32.totalorder %s15, 1
        %s125 = scalar_select %p124, %s15, 1
        %p126 = scmp.lt.s32.totalorder %s16, 0
        %s127 = scalar_select %p126, %s16, 0
        %s128 = sadd.s32 %s127, %s125
        %s129 = smul.addr %s128, 8
        %s130 = scalar_lea.vmem %s0, %s129
      $region20: #{weighted_cross_entropy_loss.1} parent=15 // pred_fallthru
        _
      // Predicated region
      $region21: #{weighted_cross_entropy_loss.1} parent=15 // pred_check
        %p131 = pneg %p70
      $region22: #{weighted_cross_entropy_loss.1} parent=15 // pred_check_branch
        %133 = sbr.rel (%p131) target = $region24
      $region23: #{weighted_cross_entropy_loss.1} parent=15 // pred_region
        %p134 = scmp.lt.s32.totalorder %s15, 1
        %s135 = scalar_select %p134, %s15, 1
        %p136 = scmp.lt.s32.totalorder %s16, 0
        %s137 = scalar_select %p136, %s16, 0
        %s138 = smul.addr %s135, 4
        %s139 = sadd.s32 %s137, %s138
        %s140 = smul.addr %s139, 8
        %s141 = scalar_lea.vmem %s1, %s140
      $region24: #{weighted_cross_entropy_loss.1} parent=15 // pred_fallthru
        _
    $region16: #{weighted_cross_entropy_loss.1} parent=5 // pred_fallthru
      _
    %p142 = scmp.le.s32.totalorder 1, %s8
    %p143 = scmp.lt.s32.totalorder %s8, 3
    %p144 = pnand %p142, %p143
    %p145 = pneg %p144
    // Predicated region
    $region25: #{weighted_cross_entropy_loss.1} parent=5 // pred_check
      _
    $region26: #{weighted_cross_entropy_loss.1} parent=5 // pred_check_branch
      %147 = sbr.rel (%p144) target = $region28
    $region27: #{weighted_cross_entropy_loss.1} parent=5 // pred_region
      %s148 = ssub.s32 %s8, 1
      %p149 = scmp.lt.s32.totalorder %s17, 1
      %s150 = scalar_select %p149, %s17, 1
      %p151 = scmp.lt.s32.totalorder %s18, 0
      %s152 = scalar_select %p151, %s18, 0
      %s153 = sadd.s32 %s152, %s150
      %s154 = smul.addr %s153, 8
      %s155 = scalar_lea.vmem %s0, %s154
      %p156 = pneg %p48
      %p157 = pneg %p45
      %p158 = scmp.lt.s32.totalorder %s17, 1
      %s159 = scalar_select %p158, %s17, 1
      %p160 = scmp.lt.s32.totalorder %s18, 0
      %s161 = scalar_select %p160, %s18, 0
      %s162 = smul.addr %s159, 4
      %s163 = sadd.s32 %s161, %s162
      %s164 = smul.addr %s163, 8
      %s165 = scalar_lea.vmem %s1, %s164
      %p166 = pneg %p76
      %p167 = pneg %p73
      %p168 = pneg %p102
      %p169 = pneg %p99
      %p170 = scmp.lt.s32.totalorder %s17, 1
      %s171 = scalar_select %p170, %s17, 1
      %s172 = scalar_lea.vmem %s2, %s171
      %p173 = scmp.lt.s32.totalorder %s17, 1
      %s174 = scalar_select %p173, %s17, 1
      %p175 = scmp.lt.s32.totalorder %s18, 0
      %s176 = scalar_select %p175, %s18, 0
      %s177 = sadd.s32 %s176, %s174
      %s178 = smul.addr %s177, 8
      %s179 = scalar_lea.vmem %s0, %s178
      %p180 = scmp.lt.s32.totalorder %s17, 1
      %s181 = scalar_select %p180, %s17, 1
      %p182 = scmp.lt.s32.totalorder %s18, 0
      %s183 = scalar_select %p182, %s18, 0
      %s184 = smul.addr %s181, 4
      %s185 = sadd.s32 %s183, %s184
      %s186 = smul.addr %s185, 8
      %s187 = scalar_lea.vmem %s1, %s186
      %p188 = scmp.lt.s32.totalorder %s17, 1
      %s189 = scalar_select %p188, %s17, 1
      %s190 = scalar_lea.vmem %s2, %s189
      %p191 = scmp.eq.s32.totalorder %s18, 0
      // Predicated region
      $region29: #{weighted_cross_entropy_loss.1} parent=27 // pred_check
        %p192 = pneg %p191
      $region30: #{weighted_cross_entropy_loss.1} parent=27 // pred_check_branch
        %194 = sbr.rel (%p192) target = $region32
      $region31: #{weighted_cross_entropy_loss.1} parent=27 // pred_region
        %195 = vst [vmem:[%s190] sm:$0x1] 0.0
      $region32: #{weighted_cross_entropy_loss.1} parent=27 // pred_fallthru
        _
      %v196 = vld [vmem:[%s179] sm:$0xff]
      %v197 = vld [vmem:[%s187] sm:$0xff]
      %vm198 = vcmp.eq.s32.totalorder %v196, 0
      %v199 = vsub.f32 1.0, %v197
      %v200 = vsel %vm198, %v197, %v199
      %v201 = vlog2.pop %v200
      %v202 = vmul.f32 %v201, 0.6931472
      %v203 = vmax.f32 %v202, -100.0
      %v204 = vsub.f32 0.0, %v203
      %s205 = scalar_lea.vmem %s187, 8
      %v206 = vld [vmem:[%s205] sm:$0xff]
      %vm207 = vcmp.eq.s32.totalorder %v196, 1
      %v208 = vsub.f32 1.0, %v206
      %v209 = vsel %vm207, %v206, %v208
      %v210 = vlog2.pop %v209
      %v211 = vmul.f32 %v210, 0.6931472
      %v212 = vmax.f32 %v211, -100.0
      %v213 = vsub.f32 %v204, %v212
      %s214 = scalar_lea.vmem %s187, 16
      %v215 = vld [vmem:[%s214] sm:$0xff]
      %vm216 = vcmp.eq.s32.totalorder %v196, 2
      %v217 = vsub.f32 1.0, %v215
      %v218 = vsel %vm216, %v215, %v217
      %v219 = vlog2.pop %v218
      %v220 = vmul.f32 %v219, 0.6931472
      %v221 = vmax.f32 %v220, -100.0
      %v222 = vsub.f32 %v213, %v221
      %s223 = scalar_lea.vmem %s187, 24
      %v224 = vld [vmem:[%s223] sm:$0xff]
      %vm225 = vcmp.eq.s32.totalorder %v196, 3
      %v226 = vsub.f32 1.0, %v224
      %v227 = vsel %vm225, %v224, %v226
      %v228 = vlog2.pop %v227
      %v229 = vmul.f32 %v228, 0.6931472
      %v230 = vmax.f32 %v229, -100.0
      %v231 = vsub.f32 %v222, %v230
      %v232 = vld [vmem:[%s190] sm:$0x1]
      %v233 = vrot.slane %v231, 4
      %v234 = vadd.f32 %v231, %v233
      %v235 = vrot.slane %v234, 2
      %v236 = vadd.f32 %v234, %v235
      %v237 = vrot.slane %v236, 1
      %v238 = vadd.f32 %v236, %v237
      %v239 = vadd.f32 %v232, %v238
      %240 = vst [vmem:[%s190] sm:$0x1] %v239
      %p241 = scmp.lt.s32.totalorder %s17, 1
      %s242 = scalar_select %p241, %s17, 1
      %s243 = scalar_lea.vmem %s2, %s242
      // Predicated region
      $region33: #{weighted_cross_entropy_loss.1} parent=27 // pred_check
        %p244 = pneg %p99
      $region34: #{weighted_cross_entropy_loss.1} parent=27 // pred_check_branch
        %246 = sbr.rel (%p244) target = $region36
      $region35: #{weighted_cross_entropy_loss.1} parent=27 // pred_region
        _
      $region36: #{weighted_cross_entropy_loss.1} parent=27 // pred_fallthru
        _
    $region28: #{weighted_cross_entropy_loss.1} parent=5 // pred_fallthru
      _
    %p247 = scmp.le.s32.totalorder 2, %s8
    // Predicated region
    $region37: #{weighted_cross_entropy_loss.1} parent=5 // pred_check
      %p248 = pneg %p247
    $region38: #{weighted_cross_entropy_loss.1} parent=5 // pred_check_branch
      %250 = sbr.rel (%p248) target = $region40
    $region39: #{weighted_cross_entropy_loss.1} parent=5 // pred_region
      %s251 = ssub.s32 %s8, 2
      // Predicated region
      $region41: #{weighted_cross_entropy_loss.1} parent=39 // pred_check
        %p252 = pneg %p105
      $region42: #{weighted_cross_entropy_loss.1} parent=39 // pred_check_branch
        %254 = sbr.rel (%p252) target = $region44
      $region43: #{weighted_cross_entropy_loss.1} parent=39 // pred_region
        %p255 = scmp.lt.s32.totalorder %s19, 1
        %s256 = scalar_select %p255, %s19, 1
        %s257 = scalar_lea.vmem %s2, %s256
      $region44: #{weighted_cross_entropy_loss.1} parent=39 // pred_fallthru
        _
    $region40: #{weighted_cross_entropy_loss.1} parent=5 // pred_fallthru
      _
  $region6: #{weighted_cross_entropy_loss.1} parent=0 // loop_footer
    %s12 = sadd.s32 1, %s8
  $region7: #{weighted_cross_entropy_loss.1} parent=0 // loop_footer_branch
    %7 = sbr.rel target = $region3
  $region8: #{weighted_cross_entropy_loss.1} parent=0 // loop_exit
    _

</llo_original>
